<compile_context>
chip_gen: v5e
topology: v5e:2x2
jax: 0.10.0
libtpu: 0.0.40
codegen_flags: <defaults>
</compile_context>

<pallas_src>
from functools import partial

import jax
import jax.numpy as jnp
from jax import lax
from jax.experimental import pallas as pl
from jax.experimental.pallas import tpu as pltpu

LANE = 128


def _round_up(x, m):
    return ((x + m - 1) // m) * m


def _pad_last(x, target):
    pad = target - x.shape[-1]
    if pad <= 0:
        return x
    return jnp.pad(x, [(0, 0)] * (x.ndim - 1) + [(0, pad)])


def _pick_block(n, prefs):
    for c in prefs:
        if c <= n and n % c == 0:
            return c
    return n


# ----------------------------- Pallas kernels -----------------------------

def _linear_kernel(x_ref, w_ref, b_ref, o_ref):
    # o = x @ w + b      x:[M,K] bf16   w:[K,nblk] bf16   b:[1,nblk] f32
    o_ref[...] = (
        jnp.dot(x_ref[...], w_ref[...], preferred_element_type=jnp.float32)
        + b_ref[...]
    )


def _matmul_kernel(a_ref, b_ref, o_ref):
    # o = a @ b   (bf16 MXU operands, f32 accumulation)
    o_ref[...] = jnp.dot(a_ref[...], b_ref[...], preferred_element_type=jnp.float32)


def _cell_bn_kernel(src_ref, rid_ref, seg_ref,                       # SMEM scalar prefetch
                    ent_ref, rel_ref, relf_ref, wrel_ref,            # VMEM inputs
                    gamma_ref, beta_ref,
                    out_ref, rel_out_ref,                            # VMEM outputs
                    *, n_nodes, apply_relu, eps=1e-5):
    """Fused stand-in Cell + mean aggregation + BatchNorm1d(+ReLU) + rel update.

    Edges are dst-sorted; seg_ref[n]..seg_ref[n+1] are node n's incoming edges.
    per node n:  acc = sum_e ent[src[e]] * rel[rid[e]]   (register-carried segment sum)
                 x[n] = acc / max(deg, 1)                (written once per node)
    then vectorized BatchNorm1d (training batch stats) + optional ReLU, dense store,
    plus rel_out = rel_embed @ w_rel on the MXU.
    """
    dblk = out_ref.shape[-1]

    # --- fused relation update (MXU): rel_out = rel_embed @ w_rel ---
    rel_out_ref[...] = jnp.dot(relf_ref[...].astype(jnp.bfloat16), wrel_ref[...],
                               preferred_element_type=jnp.float32)

    zero_row = jnp.zeros((1, dblk), jnp.float32)   # hoisted out of the node loop

    # --- register-carried segment sum over dst-sorted edges (DistMult compose) ---
    @pl.loop(0, n_nodes)
    def _(n):
        start = seg_ref[n]
        stop = seg_ref[n + 1]

        def edge_body(e, acc):
            s = src_ref[e]
            r = rid_ref[e]
            return acc + ent_ref[pl.ds(s, 1), :] * rel_ref[pl.ds(r, 1), :]

        acc = lax.fori_loop(start, stop, edge_body, zero_row)
        inv_deg = 1.0 / jnp.maximum((stop - start).astype(jnp.float32), 1.0)
        out_ref[pl.ds(n, 1), :] = acc * inv_deg            # one store per node

    # --- vectorized BatchNorm1d over the node batch (+ optional ReLU), dense store ---
    x = out_ref[...]                                        # (n_nodes, dblk)
    mean = jnp.mean(x, axis=0, keepdims=True)
    var = jnp.maximum(jnp.mean(x * x, axis=0, keepdims=True) - mean * mean, 0.0)
    scale = lax.rsqrt(var + eps) * gamma_ref[...]
    shift = beta_ref[...] - mean * scale
    y = x * scale + shift
    if apply_relu:
        y = jnp.maximum(y, 0.0)
    out_ref[...] = y


# ----------------------------- pallas_call wrappers -----------------------------

def pallas_linear(x, w, b):
    M, K = x.shape
    _, N = w.shape
    nblk = _pick_block(N, (256, 128))        # 256-wide N blocks feed v6e/v7x 2x256 MXU
    return pl.pallas_call(
        _linear_kernel,
        out_shape=jax.ShapeDtypeStruct((M, N), jnp.float32),
        grid=(N // nblk,),
        in_specs=[
            pl.BlockSpec((M, K), lambda j: (0, 0)),
            pl.BlockSpec((K, nblk), lambda j: (0, j)),
            pl.BlockSpec((1, nblk), lambda j: (0, j)),
        ],
        out_specs=pl.BlockSpec((M, nblk), lambda j: (0, j)),
        compiler_params=pltpu.CompilerParams(dimension_semantics=("parallel",)),
    )(x, w, b)


def pallas_matmul(a, b):
    M, K = a.shape
    _, N = b.shape
    nblk = _pick_block(N, (256, 128))
    return pl.pallas_call(
        _matmul_kernel,
        out_shape=jax.ShapeDtypeStruct((M, N), jnp.float32),
        grid=(N // nblk,),
        in_specs=[
            pl.BlockSpec((M, K), lambda j: (0, 0)),
            pl.BlockSpec((K, nblk), lambda j: (0, j)),
        ],
        out_specs=pl.BlockSpec((M, nblk), lambda j: (0, j)),
        compiler_params=pltpu.CompilerParams(dimension_semantics=("parallel",)),
    )(a, b)


def _cell_vmem_limit(N, R, Dp, dblk):
    f32, bf16 = 4, 2
    per_step = (N * dblk * f32        # ent block
                + R * dblk * f32      # rel block (compose)
                + R * Dp * f32        # full rel (matmul LHS)
                + Dp * dblk * bf16    # w_rel block
                + 2 * dblk * f32      # gamma + beta
                + N * dblk * f32      # ent output block
                + R * dblk * f32)     # rel output block
    need = 2 * per_step + (4 << 20)   # double buffering + headroom
    try:
        cap = pltpu.get_tpu_info().vmem_capacity_bytes
    except Exception:
        cap = 64 << 20                # v7x floor
    return int(min(max(need, 16 << 20), int(cap * 0.75)))


def pallas_cell_bn(src_s, rid_s, seg, ent, rel_embed, w_rel, gamma, beta, *, apply_relu):
    """ent: [N, Dp] f32   rel_embed: [R, Dp] f32   w_rel: [Dp, Dp] bf16
       gamma/beta: [1, Dp] f32.  Returns (ent_new [N, Dp] f32, rel_new [R, Dp] f32)."""
    N, Dp = ent.shape
    R = rel_embed.shape[0]
    dblk = _pick_block(Dp, (512, 256, 128))
    kernel = partial(_cell_bn_kernel, n_nodes=N, apply_relu=apply_relu)
    return pl.pallas_call(
        kernel,
        out_shape=(jax.ShapeDtypeStruct((N, Dp), jnp.float32),
                   jax.ShapeDtypeStruct((R, Dp), jnp.float32)),
        grid_spec=pltpu.PrefetchScalarGridSpec(
            num_scalar_prefetch=3,
            grid=(Dp // dblk,),
            in_specs=[
                pl.BlockSpec((N, dblk), lambda d, *_: (0, d)),   # entity features
                pl.BlockSpec((R, dblk), lambda d, *_: (0, d)),   # relation block (compose)
                pl.BlockSpec((R, Dp), lambda d, *_: (0, 0)),     # full relation table (matmul)
                pl.BlockSpec((Dp, dblk), lambda d, *_: (0, d)),  # w_rel block
                pl.BlockSpec((1, dblk), lambda d, *_: (0, d)),   # bn gamma
                pl.BlockSpec((1, dblk), lambda d, *_: (0, d)),   # bn beta
            ],
            out_specs=[
                pl.BlockSpec((N, dblk), lambda d, *_: (0, d)),
                pl.BlockSpec((R, dblk), lambda d, *_: (0, d)),
            ],
        ),
        compiler_params=pltpu.CompilerParams(
            dimension_semantics=("parallel",),
            vmem_limit_bytes=_cell_vmem_limit(N, R, Dp, dblk),
        ),
    )(src_s, rid_s, seg, ent, rel_embed, rel_embed, w_rel, gamma, beta)


# ----------------------------- model (parameters + forward glue) -----------------------------

class NetworkPallas:
    def __init__(self, key, number_of_nodes, num_rels, layers, zero_nodes, first_nodes,
                 last_nodes, feature_dim, init_fea_dim, num_base_r, gamma,
                 dropout_cell, drop_aggr):
        self.layers = layers
        self.num_ent = number_of_nodes
        self.num_rel = num_rels * 2 + 1
        self.feature_dim = feature_dim
        self.init_fea_dim = init_fea_dim
        self.num_base_r = num_base_r
        self.gamma = gamma
        self.dropout_cell = dropout_cell        # 0.0 -> exact identity
        self.drop_aggr = drop_aggr

        self.dp = _round_up(feature_dim, LANE)  # lane-dense padded feature dim
        self.kp = _round_up(init_fea_dim, LANE)
        Dp, Kp = self.dp, self.kp

        self.nb_zero_edges = zero_nodes
        self.nb_first_edges = sum(zero_nodes + i for i in range(first_nodes))
        self.nb_middle_edges = first_nodes
        self.nb_last_edges = sum(first_nodes + i for i in range(last_nodes))
        self.nb_final_edges = 1

        ks = jax.random.split(key, 12)
        gain = jnp.sqrt(2.0)  # relu gain for xavier_normal_

        def xavier(k, shape):
            std = gain * jnp.sqrt(2.0 / (shape[0] + shape[1]))
            return std * jax.random.normal(k, shape, jnp.float32)

        # embeddings / projection weights, zero-padded to 128-lane multiples.
        # MXU operands stored bf16 (f32 accumulation in-kernel); VPU-side tensors stay f32.
        self.embedding_h = _pad_last(
            jax.random.normal(ks[0], (self.num_ent, init_fea_dim), jnp.float32), Kp
        ).astype(jnp.bfloat16)
        self.embedding_e = _pad_last(
            jax.random.normal(ks[1], (num_base_r, feature_dim), jnp.float32), Dp
        ).astype(jnp.bfloat16)

        w_e = (1.0 / jnp.sqrt(init_fea_dim)) * jax.random.normal(
            ks[2], (init_fea_dim, feature_dim), jnp.float32)          # stored transposed
        self.linear_e_w = jnp.pad(
            w_e, ((0, Kp - init_fea_dim), (0, Dp - feature_dim))).astype(jnp.bfloat16)
        self.linear_e_b = _pad_last(
            (1.0 / jnp.sqrt(init_fea_dim)) * jax.random.normal(
                ks[3], (1, feature_dim), jnp.float32), Dp)            # f32

        self.rel_wt = xavier(ks[4], (self.num_rel, num_base_r)).astype(jnp.bfloat16)
        self.w_rel = jnp.pad(
            xavier(ks[5], (feature_dim, feature_dim)),
            ((0, Dp - feature_dim), (0, Dp - feature_dim))).astype(jnp.bfloat16)

        # BatchNorm1d params; padded columns get gamma=0 / beta=0 so they stay exactly zero.
        self.bn_gamma = _pad_last(jnp.ones((1, feature_dim), jnp.float32), Dp)
        self.bn_beta = jnp.zeros((1, Dp), jnp.float32)

        # architecture parameters (alphas).  Op-list lengths are placeholders because
        # PRE_OPS/FIRST_OPS/MIDDLE_OPS/LAST_OPS/SF_OPS are not in the provided source.
        n_ops = dict(zero=3, first=5, middle=4, last=5, final=3)
        self.alphas_zero = 0.001 * jax.random.normal(ks[6], (self.nb_zero_edges * layers, n_ops["zero"]))
        self.alphas_first = 0.001 * jax.random.normal(ks[7], (self.nb_first_edges * layers, n_ops["first"]))
        self.alphas_middle = 0.001 * jax.random.normal(ks[8], (self.nb_middle_edges * layers, n_ops["middle"]))
        self.alphas_last = 0.001 * jax.random.normal(ks[9], (self.nb_last_edges * layers, n_ops["last"]))
        self.alphas_final = 0.001 * jax.random.normal(ks[10], (self.nb_final_edges, n_ops["final"]))

    def show_weights(self, i):
        sl = lambda a, n: jax.nn.softmax(a[i * n:(i + 1) * n], axis=1)
        return (sl(self.alphas_zero, self.nb_zero_edges),
                sl(self.alphas_first, self.nb_first_edges),
                sl(self.alphas_middle, self.nb_middle_edges),
                sl(self.alphas_last, self.nb_last_edges))

    def forward(self, num_nodes, node_id, src_in, dst_in, edge_type):
        """Mirrors Network._forward_lp.

        num_nodes : number of nodes in g_train (local ids 0..num_nodes-1)
        node_id   : [num_nodes] local -> global entity id
        src_in    : [E] local source id per edge
        dst_in    : [E] local destination id per edge (the g_train structure)
        edge_type : [E] relation id per edge (0 .. 2*num_rels-1)
        """
        # layer-0 entity features: gather ONLY the num_nodes rows referenced by node_id,
        # then project with the fused matmul+bias kernel (bf16 MXU, f32 accumulate).
        # TODO(synk): at num_ent >> VMEM this row gather should become a scalar-prefetched
        #             Pallas gather-and-project kernel (node_id in SMEM, manual row DMA).
        emb_sel = jnp.take(self.embedding_h, node_id, axis=0)           # [N, Kp] bf16
        ent = pallas_linear(emb_sel, self.linear_e_w, self.linear_e_b)  # [N, Dp] f32

        # rel_embed = rel_wt @ embedding_e(idx_rel)
        rel_embed = pallas_matmul(self.rel_wt, self.embedding_e)        # [num_rel, Dp] f32

        nodes = jnp.arange(num_nodes, dtype=jnp.int32)
        src_f = jnp.concatenate([src_in.astype(jnp.int32), nodes], axis=0)
        dst_f = jnp.concatenate([dst_in.astype(jnp.int32), nodes], axis=0)   # + self loops
        rel_f = jnp.concatenate(
            [edge_type.astype(jnp.int32),
             jnp.full((num_nodes,), self.num_rel - 1, jnp.int32)], axis=0)

        # dst-sort the edge list once; per-node segment boundaries go to SMEM
        order = jnp.argsort(dst_f)
        src_s = src_f[order]
        rid_s = rel_f[order]
        dst_s = dst_f[order]
        seg = jnp.searchsorted(dst_s, jnp.arange(num_nodes + 1, dtype=jnp.int32),
                               side='left').astype(jnp.int32)

        for i in range(self.layers):
            # arch weights (softmax); consumed by the undefined Cell -- see TODO at top.
            _W_zero, _W_first, _W_middle, _W_last = self.show_weights(i)
            apply_relu = (self.layers == 1) if i == 0 else True

            ent, rel_embed = pallas_cell_bn(
                src_s, rid_s, seg, ent, rel_embed, self.w_rel,
                self.bn_gamma, self.bn_beta, apply_relu=apply_relu)
            # F.dropout with p = dropout_cell = 0.0 -> identity

        ent_out = ent[:, :self.feature_dim]
        rel_out = rel_embed[:, :self.feature_dim]
        return ent_out, rel_out


# ----------------------------- demo -----------------------------

if __name__ == "__main__":
    key = jax.random.PRNGKey(0)
    k_model, k_nid, k_src, k_dst, k_rel = jax.random.split(key, 5)

    # small, forward-consistent sizes
    num_ent = 32          # number_of_nodes (entity table)
    num_rels = 3          # -> _num_rel = 7
    layers = 2
    zero_nodes, first_nodes, last_nodes = 1, 2, 1
    feature_dim = 32
    init_fea_dim = 16
    num_base_r = 4
    gamma = 9.0
    dropout_cell = 0.0
    drop_aggr = 0.0

    num_nodes = 16        # nodes in the sampled subgraph g_train
    num_edges = 24

    model = NetworkPallas(k_model, num_ent, num_rels, layers, zero_nodes, first_nodes,
                          last_nodes, feature_dim, init_fea_dim, num_base_r, gamma,
                          dropout_cell, drop_aggr)

    node_id = jax.random.permutation(k_nid, num_ent)[:num_nodes].astype(jnp.int32)
    src_in = jax.random.randint(k_src, (num_edges,), 0, num_nodes, jnp.int32)
    dst_in = jax.random.randint(k_dst, (num_edges,), 0, num_nodes, jnp.int32)
    edge_type = jax.random.randint(k_rel, (num_edges,), 0, 2 * num_rels, jnp.int32)

    ent_emb, rel_emb = model.forward(num_nodes, node_id, src_in, dst_in, edge_type)
    jax.block_until_ready((ent_emb, rel_emb))

    assert ent_emb.shape == (num_nodes, feature_dim)
    assert rel_emb.shape == (2 * num_rels + 1, feature_dim)
    assert jnp.all(jnp.isfinite(ent_emb)) and jnp.all(jnp.isfinite(rel_emb))
    print("KERNEL_OK")
</pallas_src>

<mosaic_0001>
module attributes {stable_mosaic.version = 11 : i64} {
  func.func @_linear_kernel(%arg0: i32, %arg1: memref<16x128xbf16, #tpu.memory_space<vmem>>, %arg2: memref<128x128xbf16, #tpu.memory_space<vmem>>, %arg3: memref<1x128xf32, #tpu.memory_space<vmem>>, %arg4: memref<16x128xf32, #tpu.memory_space<vmem>>) attributes {dimension_semantics = [#tpu.dimension_semantics<parallel>], iteration_bounds = array<i64: 1>, scalar_prefetch = 0 : i64, scratch_operands = 0 : i64, tpu.core_type = #tpu.core_type<tc>, window_params = [{pipeline_mode = #tpu.pipeline_mode<synchronous>, transform_indices = @transform_0, window_bounds = array<i64: 16, 128>}, {transform_indices = @transform_1, window_bounds = array<i64: 128, 128>}, {transform_indices = @transform_2, window_bounds = array<i64: 1, 128>}, {transform_indices = @transform_3, window_bounds = array<i64: 16, 128>}]} {
    %c0 = arith.constant 0 : index
    %c0_0 = arith.constant 0 : index
    %0 = vector.load %arg1[%c0, %c0_0] : memref<16x128xbf16, #tpu.memory_space<vmem>>, vector<16x128xbf16>
    %c0_1 = arith.constant 0 : index
    %c0_2 = arith.constant 0 : index
    %1 = vector.load %arg2[%c0_1, %c0_2] : memref<128x128xbf16, #tpu.memory_space<vmem>>, vector<128x128xbf16>
    %cst = arith.constant dense<0.000000e+00> : vector<16x128xf32>
    %2 = tpu.matmul %0, %1, %cst {dimension_numbers = #tpu.dot_dimension_numbers<[1], [0], [0], [1], [0, 0, 1, 1], [], []>} : vector<16x128xbf16>, vector<128x128xbf16>, vector<16x128xf32> -> vector<16x128xf32>
    %c0_3 = arith.constant 0 : index
    %c0_4 = arith.constant 0 : index
    %3 = vector.load %arg3[%c0_3, %c0_4] : memref<1x128xf32, #tpu.memory_space<vmem>>, vector<1x128xf32>
    %4 = vector.broadcast %3 : vector<1x128xf32> to vector<16x128xf32>
    %5 = arith.addf %2, %4 : vector<16x128xf32>
    %c0_5 = arith.constant 0 : index
    %c0_6 = arith.constant 0 : index
    %6 = vector.load %arg4[%c0_5, %c0_6] : memref<16x128xf32, #tpu.memory_space<vmem>>, vector<16x128xf32>
    tpu.vector_store %arg4[%c0_5, %c0_6], %5 {strides = array<i32>} : memref<16x128xf32, #tpu.memory_space<vmem>>, vector<16x128xf32>,
    return
  }
  func.func @transform_0(%arg0: i32) -> (i32, i32) {
    %c0_i32 = arith.constant 0 : i32
    %c0_i32_0 = arith.constant 0 : i32
    %c0_i32_1 = arith.constant 0 : i32
    return %c0_i32, %c0_i32_0 : i32, i32
  }
  func.func @transform_1(%arg0: i32) -> (i32, i32) {
    %c0_i32 = arith.constant 0 : i32
    %c0_i32_0 = arith.constant 0 : i32
    return %c0_i32, %arg0 : i32, i32
  }
  func.func @transform_2(%arg0: i32) -> (i32, i32) {
    %c0_i32 = arith.constant 0 : i32
    %c0_i32_0 = arith.constant 0 : i32
    return %c0_i32, %arg0 : i32, i32
  }
  func.func @transform_3(%arg0: i32) -> (i32, i32) {
    %c0_i32 = arith.constant 0 : i32
    %c0_i32_0 = arith.constant 0 : i32
    return %c0_i32, %arg0 : i32, i32
  }
}

</mosaic_0001>

<llo_original>
// kernel: tpu_custom_call.1
$region0: #{tpu_custom_call.1}
  #allocation0 [shape = 'u32[]', space=smem, size = 0x4, offset = 0x4, fixed_abs, tag = 'smem constant byte address 0x4 - core index']
  #allocation1 [shape = 'u32[72,128]{1,0:T(1,128)}', space=vmem, size = 0x9000, scoped, tag = 'internal scratch']
  %s0 = inlined_call_operand.hbm [shape: bf16[16,128], index: 0, kind: input, shape index: {}]
  %s1 = inlined_call_operand.hbm [shape: bf16[128,128], index: 1, kind: input, shape index: {}]
  %s2 = inlined_call_operand.vmem [shape: f32[1,128], index: 2, kind: input, shape index: {}]
  %s3 = inlined_call_operand.hbm [shape: f32[16,128], index: 3, kind: output, shape index: {}]
  %s4 = sld [smem:[#allocation0]]
  $region30: #{tpu_custom_call.1} parent=0
    _
  %s6 = ssub.s32 1, %s4
  %s7 = scalar_select 0, %s6, %s4
  $region1: #{tpu_custom_call.1} parent=0
    #allocation2 [shape = 'u8[4096]{0}', space=vmem, size = 0x1000, scoped, tag = 'input window, operand 0, single buffered']
    #allocation3 [shape = 's32[1]{0}', space=sflag, size = 0x4, scoped, tag = 'scoped memory for tpu_custom_call.1']
    #allocation4 [shape = 's32[1]{0}', space=sflag, size = 0x4, scoped, tag = 'scoped memory for tpu_custom_call.1']
    #allocation5 [shape = 'u8[32768]{0}', space=vmem, size = 0x8000, scoped, tag = 'input window, operand 1, single buffered']
    #allocation6 [shape = 's32[1]{0}', space=sflag, size = 0x4, scoped, tag = 'scoped memory for tpu_custom_call.1']
    #allocation7 [shape = 'u8[8192]{0}', space=vmem, size = 0x2000, scoped, tag = 'output window, operand 0, single buffered']
    %8 = vsyncpa [#allocation3], 0
    %9 = vsyncpa [#allocation6], 0
    %10 = vsyncpa [#allocation4], 0
    // Predicated region
    $region2: #{tpu_custom_call.1} parent=1 // pred_check
      _
    $region3: #{tpu_custom_call.1} parent=1 // pred_check_branch
      %12 = sbr.rel (0) target = $region5
    $region4: #{tpu_custom_call.1} parent=1 // pred_region
      %14 = vsyncadd [#allocation3], 0
      %s15 = sshll.u32 %s0, 4
      %s16 = int_to_ptr.hbm [resolvable:$true] %s15
      %s17 = sshll.u32 [#allocation2], 4
      %s18 = int_to_ptr.vmem [resolvable:$true] %s17
      %23 = dma.hbm_to_vmem [thread:$0]  %s16, 128, %s18, [#allocation3], 64, 64, 4
    $region5: #{tpu_custom_call.1} parent=1 // pred_fallthru
      _
    // Predicated region
    $region6: #{tpu_custom_call.1} parent=1 // pred_check
      _
    $region7: #{tpu_custom_call.1} parent=1 // pred_check_branch
      %25 = sbr.rel (0) target = $region9
    $region8: #{tpu_custom_call.1} parent=1 // pred_region
      %27 = vsyncadd [#allocation6], 0
      %s28 = sshll.u32 %s1, 4
      %s29 = int_to_ptr.hbm [resolvable:$true] %s28
      %s30 = sshll.u32 [#allocation5], 4
      %s31 = int_to_ptr.vmem [resolvable:$true] %s30
      %36 = dma.hbm_to_vmem [thread:$0]  %s29, 1024, %s31, [#allocation6], 64, 64, 4
    $region9: #{tpu_custom_call.1} parent=1 // pred_fallthru
      _
    // Predicated region
    $region10: #{tpu_custom_call.1} parent=1 // pred_check
      _
    $region11: #{tpu_custom_call.1} parent=1 // pred_check_branch
      %38 = sbr.rel (0) target = $region13
    $region12: #{tpu_custom_call.1} parent=1 // pred_region
      _
    $region13: #{tpu_custom_call.1} parent=1 // pred_fallthru
      _
    // Predicated region
    $region14: #{tpu_custom_call.1} parent=1 // pred_check
      _
    $region15: #{tpu_custom_call.1} parent=1 // pred_check_branch
      %40 = sbr.rel (0) target = $region17
    $region16: #{tpu_custom_call.1} parent=1 // pred_region
      %42 = dma.done [#allocation3], 128
    $region17: #{tpu_custom_call.1} parent=1 // pred_fallthru
      _
    // Predicated region
    $region18: #{tpu_custom_call.1} parent=1 // pred_check
      _
    $region19: #{tpu_custom_call.1} parent=1 // pred_check_branch
      %44 = sbr.rel (0) target = $region21
    $region20: #{tpu_custom_call.1} parent=1 // pred_region
      %46 = dma.done [#allocation6], 1024
    $region21: #{tpu_custom_call.1} parent=1 // pred_fallthru
      _
    %v47 = vld [vmem:[#allocation2] sm:$0xf]
    %v48 = vld [vmem:[#allocation2 + $0x4] sm:$0xf]
    %v49 = vld [vmem:[#allocation5] sm:$0xf]
    %v50 = vld [vmem:[#allocation5 + $0x4] sm:$0xf]
    %v51 = vld [vmem:[#allocation5 + $0x8] sm:$0xf]
    %v52 = vld [vmem:[#allocation5 + $0xc] sm:$0xf]
    %v53 = vld [vmem:[#allocation5 + $0x10] sm:$0xf]
    %v54 = vld [vmem:[#allocation5 + $0x14] sm:$0xf]
    %v55 = vld [vmem:[#allocation5 + $0x18] sm:$0xf]
    %v56 = vld [vmem:[#allocation5 + $0x1c] sm:$0xf]
    %v57 = vld [vmem:[#allocation5 + $0x20] sm:$0xf]
    %v58 = vld [vmem:[#allocation5 + $0x24] sm:$0xf]
    %v59 = vld [vmem:[#allocation5 + $0x28] sm:$0xf]
    %v60 = vld [vmem:[#allocation5 + $0x2c] sm:$0xf]
    %v61 = vld [vmem:[#allocation5 + $0x30] sm:$0xf]
    %v62 = vld [vmem:[#allocation5 + $0x34] sm:$0xf]
    %v63 = vld [vmem:[#allocation5 + $0x38] sm:$0xf]
    %v64 = vld [vmem:[#allocation5 + $0x3c] sm:$0xf]
    %v65 = vld [vmem:[%s2] sm:$0x1]
    %v67 = vperm.slane %v65, 0
    %v71 = vunpack.c.l.b16 %v47
    %v72 = vunpack.c.l.b16 %v48
    %v73 = vpack.c.b16 %v72, %v71
    %v91 = vunpack.c.l.b16 %v49
    %v92 = vunpack.c.l.b16 %v50
    %v93 = vunpack.c.l.b16 %v51
    %v94 = vunpack.c.l.b16 %v52
    %v95 = vunpack.c.l.b16 %v53
    %v96 = vunpack.c.l.b16 %v54
    %v97 = vunpack.c.l.b16 %v55
    %v98 = vunpack.c.l.b16 %v56
    %v99 = vunpack.c.l.b16 %v57
    %v100 = vunpack.c.l.b16 %v58
    %v101 = vunpack.c.l.b16 %v59
    %v102 = vunpack.c.l.b16 %v60
    %v103 = vunpack.c.l.b16 %v61
    %v104 = vunpack.c.l.b16 %v62
    %v105 = vunpack.c.l.b16 %v63
    %v106 = vunpack.c.l.b16 %v64
    %v107 = vpack.c.b16 %v92, %v91
    %v108 = vpack.c.b16 %v94, %v93
    %v109 = vpack.c.b16 %v96, %v95
    %v110 = vpack.c.b16 %v98, %v97
    %v111 = vpack.c.b16 %v100, %v99
    %v112 = vpack.c.b16 %v102, %v101
    %v113 = vpack.c.b16 %v104, %v103
    %v114 = vpack.c.b16 %v106, %v105
    %123 = vmatpush.bf16.msra.mxu0 %v114
    %124 = vmatpush.bf16.msra.mxu0 %v113
    %125 = vmatpush.bf16.msra.mxu0 %v112
    %126 = vmatpush.bf16.msra.mxu0 %v111
    %127 = vmatpush.bf16.msra.mxu0 %v110
    %128 = vmatpush.bf16.msra.mxu0 %v109
    %129 = vmatpush.bf16.msra.mxu0 %v108
    %130 = vmatpush.bf16.msra.mxu0 %v107
    %131 = vmatmul.bf16.gmra.mxu0 %v73
    %v132 = vpop.f32.mrf.mxu0
    %v133 = vadd.f32 %v67, %v132
    %v134 = vpop.f32.mrf.mxu0
    %v135 = vadd.f32 %v67, %v134
    %136 = vdwg.mxu0
    %137 = vst [vmem:[#allocation7] sm:$0xff] %v133
    %138 = vst [vmem:[#allocation7 + $0x8] sm:$0xff] %v135
    // Predicated region
    $region22: #{tpu_custom_call.1} parent=1 // pred_check
      _
    $region23: #{tpu_custom_call.1} parent=1 // pred_check_branch
      %140 = sbr.rel (0) target = $region25
    $region24: #{tpu_custom_call.1} parent=1 // pred_region
      %142 = vsyncadd [#allocation4], 0
      %s143 = sshll.u32 [#allocation7], 4
      %s144 = int_to_ptr.vmem [resolvable:$true] %s143
      %s145 = sshll.u32 %s3, 4
      %s146 = int_to_ptr.hbm [resolvable:$true] %s145
      %151 = dma.vmem_to_hbm [thread:$0]  %s144, 256, %s146, [#allocation4], 128, 128, 8
    $region25: #{tpu_custom_call.1} parent=1 // pred_fallthru
      _
    // Predicated region
    $region26: #{tpu_custom_call.1} parent=1 // pred_check
      _
    $region27: #{tpu_custom_call.1} parent=1 // pred_check_branch
      %153 = sbr.rel (0) target = $region29
    $region28: #{tpu_custom_call.1} parent=1 // pred_region
      %155 = dma.done [#allocation4], 256
    $region29: #{tpu_custom_call.1} parent=1 // pred_fallthru
      _
    %156 = vsyncpa [#allocation3], 1
    %157 = vsyncpa [#allocation6], 1
    %158 = vsyncpa [#allocation4], 1

</llo_original>
